<compile_context>
chip_gen: v7x
topology: tpu7x:2x2x1
jax: 0.10.0
libtpu: 0.0.40
codegen_flags: <defaults>
</compile_context>

<pallas_src>
import functools
import math
from typing import Any, NamedTuple

import jax
import jax.numpy as jnp
from jax import lax
from jax.experimental import pallas as pl
from jax.experimental.pallas import tpu as pltpu


_INV_SQRT2 = 1.0 / math.sqrt(2.0)


def _round_up(x: int, m: int) -> int:
    return (x + m - 1) // m * m


# --------------------------- hardware introspection ---------------------------
def _vmem_capacity_bytes() -> int:
    """Physical VMEM per TensorCore; conservative (v7x) default if unknown."""
    try:
        return int(pltpu.get_tpu_info().vmem_capacity_bytes)
    except Exception:
        return 64 << 20


def _num_tensorcores() -> int:
    """2 on v7x (megacore grid sharding), 1 on v5e/v6e."""
    try:
        kind = jax.devices()[0].device_kind.lower()
        if "v7" in kind or "tpu7" in kind or "7x" in kind:
            return 2
    except Exception:
        pass
    return 1


# --------------------------------- kernel -------------------------------------
def _mlp_fused_kernel(*refs, n_layers: int):
    # refs = (x_ref, w0, b0, w1, b1, ..., w_{L-1}, b_{L-1}, o_ref)
    x_ref = refs[0]
    o_ref = refs[1 + 2 * n_layers]

    h = x_ref[...]  # (tm, K0p), compute dtype
    for li in range(n_layers):
        w_ref = refs[1 + 2 * li]   # (Kp, Np), compute dtype
        b_ref = refs[2 + 2 * li]   # (1, Np), f32
        # MXU matmul, operands in compute dtype, f32 accumulation.
        y = jnp.dot(h.astype(w_ref.dtype), w_ref[...],
                    preferred_element_type=jnp.float32)
        y = y + b_ref[...]  # bias-add in f32
        if li != n_layers - 1:
            # exact (erf-based) GELU, matching torch.nn.GELU(), in f32
            y = 0.5 * y * (1.0 + lax.erf(y * _INV_SQRT2))
        h = y  # stays f32; recast to compute dtype at the next dot
    o_ref[...] = h.astype(o_ref.dtype)


# ------------------------- parameter preparation (once) -----------------------
class PreparedMLP(NamedTuple):
    wb: tuple          # (w0, b0, w1, b1, ...) padded + pre-cast
    pdims: tuple       # padded feature dims, len = n_layers + 1
    in_dim: int
    out_dim: int
    compute_dtype: Any


def prepare_mlp_params(params, *, compute_dtype=jnp.bfloat16) -> PreparedMLP:
    """Pad every feature dim to a multiple of 128 and cast weights to the
    compute dtype ONCE.  Call this at init time, not per forward."""
    dims = [params[0][0].shape[0]] + [w.shape[1] for (w, _) in params]
    pdims = tuple(_round_up(d, 128) for d in dims)
    wb = []
    for li, (w, b) in enumerate(params):
        Kp, Np = pdims[li], pdims[li + 1]
        wp = jnp.zeros((Kp, Np), compute_dtype).at[: w.shape[0], : w.shape[1]].set(
            w.astype(compute_dtype))
        bp = jnp.zeros((1, Np), jnp.float32).at[:, : b.shape[-1]].set(
            b.astype(jnp.float32).reshape(1, -1))
        wb += [wp, bp]
    return PreparedMLP(wb=tuple(wb), pdims=pdims, in_dim=dims[0],
                       out_dim=dims[-1], compute_dtype=jnp.dtype(compute_dtype))


# ----------------------------- tiling / specs ---------------------------------
def _choose_tile_rows(M, pdims, c_item, o_item, weight_bytes, vmem_budget,
                      n_tc, max_tile_rows):
    # sublane pack of the compute dtype: fp8->32, bf16->16, f32->8
    row_align = {1: 32, 2: 16}.get(c_item, 8)
    max_w = max(pdims)

    def tile_bytes(tm):
        io = 2 * tm * (pdims[0] * c_item + pdims[-1] * o_item)  # dbl-buffered x/out
        act = tm * max_w * (4 + c_item)                         # f32 h + recast copy
        return io + act

    candidates = [c for c in (512, 384, 256, 128, 64, 32, 16, 8)
                  if c <= max_tile_rows and c % row_align == 0] or [row_align]
    tm = candidates[-1]
    for c in candidates:  # biggest tile that fits next to the resident weights
        if weight_bytes + tile_bytes(c) <= vmem_budget:
            tm = c
            break

    Mmin = _round_up(max(M, row_align), row_align)
    if n_tc <= 1:
        # Single TensorCore: the grid is a serial loop; never split small M.
        tm = min(tm, Mmin)
    else:
        # v7x (2 TCs): prefer >=2 balanced tiles of >=128 rows when M allows;
        # below 256 rows a split only wastes MXU height.
        if Mmin <= tm and Mmin >= 256:
            tm = _round_up(pl.cdiv(Mmin, 2), 128)
        elif Mmin < 256:
            tm = min(tm, Mmin)
    return max(row_align, _round_up(tm, row_align))


def _make_in_specs(pdims, tm, n_layers, single_buffer_weights):
    specs = [pl.BlockSpec((tm, pdims[0]), lambda i: (i, 0))]  # x: double-buffered
    wkw = {"pipeline_mode": pl.Buffered(1)} if single_buffer_weights else {}
    for li in range(n_layers):
        Kp, Np = pdims[li], pdims[li + 1]
        specs.append(pl.BlockSpec((Kp, Np), lambda i: (0, 0), **wkw))  # resident W
        specs.append(pl.BlockSpec((1, Np), lambda i: (0, 0), **wkw))   # resident b
    return specs


# --------------------------------- forward ------------------------------------
def mlp_fused_pallas(x, prepared: PreparedMLP, *, max_tile_rows: int = 512):
    """x: [M, in_dim] -> [M, out_dim] through the whole MLP stack, one kernel."""
    M, K0 = x.shape
    assert K0 == prepared.in_dim
    pdims = prepared.pdims
    n_layers = len(prepared.wb) // 2
    compute_dtype = prepared.compute_dtype
    out_dtype = x.dtype

    c_item = jnp.dtype(compute_dtype).itemsize
    o_item = jnp.dtype(out_dtype).itemsize
    weight_bytes = sum(int(a.size) * a.dtype.itemsize for a in prepared.wb)

    # Generation-aware VMEM budget (15% headroom for compiler temporaries).
    vmem_budget = int(0.85 * _vmem_capacity_bytes())
    # TODO(synk): if resident weights exceed the budget (huge hidden dims),
    # fall back to an N/K-tiled inner pipeline (pltpu.emit_pipeline) instead
    # of the weight-resident layout.

    n_tc = _num_tensorcores()
    tm = _choose_tile_rows(M, pdims, c_item, o_item, weight_bytes, vmem_budget,
                           n_tc, max_tile_rows)
    Mp = _round_up(max(M, tm), tm)
    grid = (Mp // tm,)

    # Pad rows + input feature dim (lane-dense); no-op when already aligned.
    if (Mp, pdims[0]) == (M, K0) and x.dtype == compute_dtype:
        xp = x
    else:
        xp = jnp.zeros((Mp, pdims[0]), compute_dtype).at[:M, :K0].set(
            x.astype(compute_dtype))

    # VMEM actually requested: resident weights (x1, single-buffered) +
    # double-buffered x/out tiles + f32 intermediate + its compute-dtype recast.
    io_bytes = 2 * tm * (pdims[0] * c_item + pdims[-1] * o_item)
    act_bytes = tm * max(pdims) * (4 + c_item)
    need = weight_bytes + io_bytes + act_bytes
    vmem_limit = int(min(vmem_budget, max(16 << 20, int(1.3 * need))))

    flops = 2 * Mp * sum(pdims[i] * pdims[i + 1] for i in range(n_layers))
    transcendentals = Mp * sum(pdims[1:-1]) if n_layers > 1 else 0
    bytes_accessed = (int(xp.size) * c_item + weight_bytes
                      + Mp * pdims[-1] * o_item)

    kernel = functools.partial(_mlp_fused_kernel, n_layers=n_layers)
    out_shape = jax.ShapeDtypeStruct((Mp, pdims[-1]), out_dtype)
    out_spec = pl.BlockSpec((tm, pdims[-1]), lambda i: (i, 0))
    cparams = pltpu.CompilerParams(
        dimension_semantics=("parallel",),
        vmem_limit_bytes=vmem_limit,
    )
    cost = pl.CostEstimate(flops=int(flops),
                           transcendentals=int(transcendentals),
                           bytes_accessed=int(bytes_accessed))

    def run(single_buffer_weights):
        in_specs = _make_in_specs(pdims, tm, n_layers, single_buffer_weights)
        return pl.pallas_call(
            kernel,
            out_shape=out_shape,
            grid=grid,
            in_specs=in_specs,
            out_specs=out_spec,
            compiler_params=cparams,
            cost_estimate=cost,
        )(xp, *prepared.wb)

    try:
        out = run(True)     # single-buffered resident weights (half the VMEM)
    except Exception:
        out = run(False)    # fallback if this jax build rejects pipeline_mode
    return out[:M, :prepared.out_dim]


def mlp_list_forward(src, params, *, compute_dtype=jnp.bfloat16):
    """src: [batch, time, in_dim] -> [batch, time, out_dim].

    `params` should be a PreparedMLP (pad/cast hoisted out of the hot path);
    a raw list of (W, b) pairs is also accepted for convenience.
    """
    if not isinstance(params, PreparedMLP):
        params = prepare_mlp_params(params, compute_dtype=compute_dtype)
    B, T, D = src.shape
    y = mlp_fused_pallas(src.reshape(B * T, D), params)
    return y.reshape(B, T, params.out_dim)


# ------------------------------ init / reference ------------------------------
def init_mlp_list_params(key, in_dim: int, d_hids: list, out_dim: int,
                         dtype=jnp.float32):
    """Deterministic init mimicking torch.nn.Linear defaults
    (uniform(-1/sqrt(fan_in), 1/sqrt(fan_in)) for weight and bias)."""
    dims = [in_dim] + list(d_hids) + [out_dim]
    params = []
    for li in range(len(dims) - 1):
        fan_in, fan_out = dims[li], dims[li + 1]
        key, kw, kb = jax.random.split(key, 3)
        bound = 1.0 / math.sqrt(fan_in)
        # weight stored as (fan_in, fan_out) so the kernel computes x @ W
        w = jax.random.uniform(kw, (fan_in, fan_out), dtype,
                               minval=-bound, maxval=bound)
        b = jax.random.uniform(kb, (1, fan_out), dtype,
                               minval=-bound, maxval=bound)
        params.append((w, b))
    return params


def mlp_list_reference(src, params):
    x = src
    n_layers = len(params)
    for li, (w, b) in enumerate(params):
        x = jnp.einsum("btk,kn->btn", x, w) + b[0]
        if li != n_layers - 1:
            x = 0.5 * x * (1.0 + lax.erf(x / jnp.sqrt(2.0)))
    return x


if __name__ == "__main__":
    batch, time, in_dim = 2, 8, 32
    d_hids = [64, 48]
    out_dim = 32

    key = jax.random.PRNGKey(0)
    key, k_src = jax.random.split(key)
    src = jax.random.normal(k_src, (batch, time, in_dim), jnp.float32)
    params = init_mlp_list_params(key, in_dim, d_hids, out_dim)

    ref = mlp_list_reference(src, params)

    # Exact path: f32 operands, f32 accumulate.
    prep_f32 = prepare_mlp_params(params, compute_dtype=jnp.float32)
    out_f32 = jax.block_until_ready(mlp_list_forward(src, prep_f32))
    assert out_f32.shape == (batch, time, out_dim)
    assert jnp.allclose(out_f32, ref, atol=1e-5, rtol=1e-5)

    # Default path: bf16 operands (MXU-native on v5e/v6e/v7x), f32 accumulate,
    # bias-add and GELU in f32.  Weights were pre-padded/pre-cast exactly once.
    prep_bf16 = prepare_mlp_params(params)  # compute_dtype=jnp.bfloat16
    out_bf16 = jax.block_until_ready(mlp_list_forward(src, prep_bf16))
    assert out_bf16.shape == (batch, time, out_dim)
    assert jnp.allclose(out_bf16, ref, atol=5e-2, rtol=5e-2)

    print("KERNEL_OK")
</pallas_src>

<mosaic_0001>
module attributes {stable_mosaic.version = 11 : i64} {
  func.func @_mlp_fused_kernel(%arg0: i32, %arg1: memref<16x128xf32, #tpu.memory_space<vmem>>, %arg2: memref<128x128xf32, #tpu.memory_space<vmem>>, %arg3: memref<1x128xf32, #tpu.memory_space<vmem>>, %arg4: memref<128x128xf32, #tpu.memory_space<vmem>>, %arg5: memref<1x128xf32, #tpu.memory_space<vmem>>, %arg6: memref<128x128xf32, #tpu.memory_space<vmem>>, %arg7: memref<1x128xf32, #tpu.memory_space<vmem>>, %arg8: memref<16x128xf32, #tpu.memory_space<vmem>>) attributes {dimension_semantics = [#tpu.dimension_semantics<parallel>], iteration_bounds = array<i64: 1>, scalar_prefetch = 0 : i64, scratch_operands = 0 : i64, tpu.core_type = #tpu.core_type<tc>, window_params = [{transform_indices = @transform_0, window_bounds = array<i64: 16, 128>}, {pipeline_mode = #tpu.pipeline_mode<synchronous>, transform_indices = @transform_1, window_bounds = array<i64: 128, 128>}, {pipeline_mode = #tpu.pipeline_mode<synchronous>, transform_indices = @transform_2, window_bounds = array<i64: 1, 128>}, {pipeline_mode = #tpu.pipeline_mode<synchronous>, transform_indices = @transform_3, window_bounds = array<i64: 128, 128>}, {pipeline_mode = #tpu.pipeline_mode<synchronous>, transform_indices = @transform_4, window_bounds = array<i64: 1, 128>}, {pipeline_mode = #tpu.pipeline_mode<synchronous>, transform_indices = @transform_5, window_bounds = array<i64: 128, 128>}, {pipeline_mode = #tpu.pipeline_mode<synchronous>, transform_indices = @transform_6, window_bounds = array<i64: 1, 128>}, {transform_indices = @transform_7, window_bounds = array<i64: 16, 128>}]} {
    %c0 = arith.constant 0 : index
    %c0_0 = arith.constant 0 : index
    %0 = vector.load %arg1[%c0, %c0_0] : memref<16x128xf32, #tpu.memory_space<vmem>>, vector<16x128xf32>
    %c0_1 = arith.constant 0 : index
    %c0_2 = arith.constant 0 : index
    %1 = vector.load %arg2[%c0_1, %c0_2] : memref<128x128xf32, #tpu.memory_space<vmem>>, vector<128x128xf32>
    %cst = arith.constant dense<0.000000e+00> : vector<16x128xf32>
    %2 = tpu.matmul %0, %1, %cst {dimension_numbers = #tpu.dot_dimension_numbers<[1], [0], [0], [1], [0, 0, 1, 1], [], []>} : vector<16x128xf32>, vector<128x128xf32>, vector<16x128xf32> -> vector<16x128xf32>
    %c0_3 = arith.constant 0 : index
    %c0_4 = arith.constant 0 : index
    %3 = vector.load %arg3[%c0_3, %c0_4] : memref<1x128xf32, #tpu.memory_space<vmem>>, vector<1x128xf32>
    %4 = vector.broadcast %3 : vector<1x128xf32> to vector<16x128xf32>
    %5 = arith.addf %2, %4 : vector<16x128xf32>
    %cst_5 = arith.constant 5.000000e-01 : f32
    %6 = vector.broadcast %cst_5 : f32 to vector<16x128xf32>
    %7 = arith.mulf %6, %5 : vector<16x128xf32>
    %cst_6 = arith.constant 0.707106769 : f32
    %8 = vector.broadcast %cst_6 : f32 to vector<16x128xf32>
    %9 = arith.mulf %5, %8 : vector<16x128xf32>
    %10 = math.erf %9 : vector<16x128xf32>
    %cst_7 = arith.constant 1.000000e+00 : f32
    %11 = vector.broadcast %cst_7 : f32 to vector<16x128xf32>
    %12 = arith.addf %11, %10 : vector<16x128xf32>
    %13 = arith.mulf %7, %12 : vector<16x128xf32>
    %c0_8 = arith.constant 0 : index
    %c0_9 = arith.constant 0 : index
    %14 = vector.load %arg4[%c0_8, %c0_9] : memref<128x128xf32, #tpu.memory_space<vmem>>, vector<128x128xf32>
    %cst_10 = arith.constant dense<0.000000e+00> : vector<16x128xf32>
    %15 = tpu.matmul %13, %14, %cst_10 {dimension_numbers = #tpu.dot_dimension_numbers<[1], [0], [0], [1], [0, 0, 1, 1], [], []>} : vector<16x128xf32>, vector<128x128xf32>, vector<16x128xf32> -> vector<16x128xf32>
    %c0_11 = arith.constant 0 : index
    %c0_12 = arith.constant 0 : index
    %16 = vector.load %arg5[%c0_11, %c0_12] : memref<1x128xf32, #tpu.memory_space<vmem>>, vector<1x128xf32>
    %17 = vector.broadcast %16 : vector<1x128xf32> to vector<16x128xf32>
    %18 = arith.addf %15, %17 : vector<16x128xf32>
    %cst_13 = arith.constant 5.000000e-01 : f32
    %19 = vector.broadcast %cst_13 : f32 to vector<16x128xf32>
    %20 = arith.mulf %19, %18 : vector<16x128xf32>
    %cst_14 = arith.constant 0.707106769 : f32
    %21 = vector.broadcast %cst_14 : f32 to vector<16x128xf32>
    %22 = arith.mulf %18, %21 : vector<16x128xf32>
    %23 = math.erf %22 : vector<16x128xf32>
    %cst_15 = arith.constant 1.000000e+00 : f32
    %24 = vector.broadcast %cst_15 : f32 to vector<16x128xf32>
    %25 = arith.addf %24, %23 : vector<16x128xf32>
    %26 = arith.mulf %20, %25 : vector<16x128xf32>
    %c0_16 = arith.constant 0 : index
    %c0_17 = arith.constant 0 : index
    %27 = vector.load %arg6[%c0_16, %c0_17] : memref<128x128xf32, #tpu.memory_space<vmem>>, vector<128x128xf32>
    %cst_18 = arith.constant dense<0.000000e+00> : vector<16x128xf32>
    %28 = tpu.matmul %26, %27, %cst_18 {dimension_numbers = #tpu.dot_dimension_numbers<[1], [0], [0], [1], [0, 0, 1, 1], [], []>} : vector<16x128xf32>, vector<128x128xf32>, vector<16x128xf32> -> vector<16x128xf32>
    %c0_19 = arith.constant 0 : index
    %c0_20 = arith.constant 0 : index
    %29 = vector.load %arg7[%c0_19, %c0_20] : memref<1x128xf32, #tpu.memory_space<vmem>>, vector<1x128xf32>
    %30 = vector.broadcast %29 : vector<1x128xf32> to vector<16x128xf32>
    %31 = arith.addf %28, %30 : vector<16x128xf32>
    %c0_21 = arith.constant 0 : index
    %c0_22 = arith.constant 0 : index
    %32 = vector.load %arg8[%c0_21, %c0_22] : memref<16x128xf32, #tpu.memory_space<vmem>>, vector<16x128xf32>
    tpu.vector_store %arg8[%c0_21, %c0_22], %31 {strides = array<i32>} : memref<16x128xf32, #tpu.memory_space<vmem>>, vector<16x128xf32>,
    return
  }
  func.func @transform_0(%arg0: i32) -> (i32, i32) {
    %c0_i32 = arith.constant 0 : i32
    %c0_i32_0 = arith.constant 0 : i32
    return %arg0, %c0_i32 : i32, i32
  }
  func.func @transform_1(%arg0: i32) -> (i32, i32) {
    %c0_i32 = arith.constant 0 : i32
    %c0_i32_0 = arith.constant 0 : i32
    %c0_i32_1 = arith.constant 0 : i32
    return %c0_i32, %c0_i32_0 : i32, i32
  }
  func.func @transform_2(%arg0: i32) -> (i32, i32) {
    %c0_i32 = arith.constant 0 : i32
    %c0_i32_0 = arith.constant 0 : i32
    %c0_i32_1 = arith.constant 0 : i32
    return %c0_i32, %c0_i32_0 : i32, i32
  }
  func.func @transform_3(%arg0: i32) -> (i32, i32) {
    %c0_i32 = arith.constant 0 : i32
    %c0_i32_0 = arith.constant 0 : i32
    %c0_i32_1 = arith.constant 0 : i32
    return %c0_i32, %c0_i32_0 : i32, i32
  }
  func.func @transform_4(%arg0: i32) -> (i32, i32) {
    %c0_i32 = arith.constant 0 : i32
    %c0_i32_0 = arith.constant 0 : i32
    %c0_i32_1 = arith.constant 0 : i32
    return %c0_i32, %c0_i32_0 : i32, i32
  }
  func.func @transform_5(%arg0: i32) -> (i32, i32) {
    %c0_i32 = arith.constant 0 : i32
    %c0_i32_0 = arith.constant 0 : i32
    %c0_i32_1 = arith.constant 0 : i32
    return %c0_i32, %c0_i32_0 : i32, i32
  }
  func.func @transform_6(%arg0: i32) -> (i32, i32) {
    %c0_i32 = arith.constant 0 : i32
    %c0_i32_0 = arith.constant 0 : i32
    %c0_i32_1 = arith.constant 0 : i32
    return %c0_i32, %c0_i32_0 : i32, i32
  }
  func.func @transform_7(%arg0: i32) -> (i32, i32) {
    %c0_i32 = arith.constant 0 : i32
    %c0_i32_0 = arith.constant 0 : i32
    return %arg0, %c0_i32 : i32, i32
  }
}

module attributes {stable_mosaic.version = 11 : i64} {
  func.func @_mlp_fused_kernel(%arg0: i32, %arg1: memref<16x128xf32, #tpu.memory_space<vmem>>, %arg2: memref<128x128xf32, #tpu.memory_space<vmem>>, %arg3: memref<1x128xf32, #tpu.memory_space<vmem>>, %arg4: memref<128x128xf32, #tpu.memory_space<vmem>>, %arg5: memref<1x128xf32, #tpu.memory_space<vmem>>, %arg6: memref<128x128xf32, #tpu.memory_space<vmem>>, %arg7: memref<1x128xf32, #tpu.memory_space<vmem>>, %arg8: memref<16x128xf32, #tpu.memory_space<vmem>>) attributes {dimension_semantics = [#tpu.dimension_semantics<parallel>], iteration_bounds = array<i64: 1>, scalar_prefetch = 0 : i64, scratch_operands = 0 : i64, tpu.core_type = #tpu.core_type<tc>, window_params = [{transform_indices = @transform_0, window_bounds = array<i64: 16, 128>}, {pipeline_mode = #tpu.pipeline_mode<synchronous>, transform_indices = @transform_1, window_bounds = array<i64: 128, 128>}, {pipeline_mode = #tpu.pipeline_mode<synchronous>, transform_indices = @transform_2, window_bounds = array<i64: 1, 128>}, {pipeline_mode = #tpu.pipeline_mode<synchronous>, transform_indices = @transform_3, window_bounds = array<i64: 128, 128>}, {pipeline_mode = #tpu.pipeline_mode<synchronous>, transform_indices = @transform_4, window_bounds = array<i64: 1, 128>}, {pipeline_mode = #tpu.pipeline_mode<synchronous>, transform_indices = @transform_5, window_bounds = array<i64: 128, 128>}, {pipeline_mode = #tpu.pipeline_mode<synchronous>, transform_indices = @transform_6, window_bounds = array<i64: 1, 128>}, {transform_indices = @transform_7, window_bounds = array<i64: 16, 128>}]} {
    %c0 = arith.constant 0 : index
    %c0_0 = arith.constant 0 : index
    %0 = vector.load %arg1[%c0, %c0_0] : memref<16x128xf32, #tpu.memory_space<vmem>>, vector<16x128xf32>
    %c0_1 = arith.constant 0 : index
    %c0_2 = arith.constant 0 : index
    %1 = vector.load %arg2[%c0_1, %c0_2] : memref<128x128xf32, #tpu.memory_space<vmem>>, vector<128x128xf32>
    %cst = arith.constant dense<0.000000e+00> : vector<16x128xf32>
    %2 = tpu.matmul %0, %1, %cst {dimension_numbers = #tpu.dot_dimension_numbers<[1], [0], [0], [1], [0, 0, 1, 1], [], []>} : vector<16x128xf32>, vector<128x128xf32>, vector<16x128xf32> -> vector<16x128xf32>
    %c0_3 = arith.constant 0 : index
    %c0_4 = arith.constant 0 : index
    %3 = vector.load %arg3[%c0_3, %c0_4] : memref<1x128xf32, #tpu.memory_space<vmem>>, vector<1x128xf32>
    %4 = vector.broadcast %3 : vector<1x128xf32> to vector<16x128xf32>
    %5 = arith.addf %2, %4 : vector<16x128xf32>
    %cst_5 = arith.constant 5.000000e-01 : f32
    %6 = vector.broadcast %cst_5 : f32 to vector<16x128xf32>
    %7 = arith.mulf %6, %5 : vector<16x128xf32>
    %cst_6 = arith.constant 0.707106769 : f32
    %8 = vector.broadcast %cst_6 : f32 to vector<16x128xf32>
    %9 = arith.mulf %5, %8 : vector<16x128xf32>
    %10 = math.erf %9 : vector<16x128xf32>
    %cst_7 = arith.constant 1.000000e+00 : f32
    %11 = vector.broadcast %cst_7 : f32 to vector<16x128xf32>
    %12 = arith.addf %11, %10 : vector<16x128xf32>
    %13 = arith.mulf %7, %12 : vector<16x128xf32>
    %c0_8 = arith.constant 0 : index
    %c0_9 = arith.constant 0 : index
    %14 = vector.load %arg4[%c0_8, %c0_9] : memref<128x128xf32, #tpu.memory_space<vmem>>, vector<128x128xf32>
    %cst_10 = arith.constant dense<0.000000e+00> : vector<16x128xf32>
    %15 = tpu.matmul %13, %14, %cst_10 {dimension_numbers = #tpu.dot_dimension_numbers<[1], [0], [0], [1], [0, 0, 1, 1], [], []>} : vector<16x128xf32>, vector<128x128xf32>, vector<16x128xf32> -> vector<16x128xf32>
    %c0_11 = arith.constant 0 : index
    %c0_12 = arith.constant 0 : index
    %16 = vector.load %arg5[%c0_11, %c0_12] : memref<1x128xf32, #tpu.memory_space<vmem>>, vector<1x128xf32>
    %17 = vector.broadcast %16 : vector<1x128xf32> to vector<16x128xf32>
    %18 = arith.addf %15, %17 : vector<16x128xf32>
    %cst_13 = arith.constant 5.000000e-01 : f32
    %19 = vector.broadcast %cst_13 : f32 to vector<16x128xf32>
    %20 = arith.mulf %19, %18 : vector<16x128xf32>
    %cst_14 = arith.constant 0.707106769 : f32
    %21 = vector.broadcast %cst_14 : f32 to vector<16x128xf32>
    %22 = arith.mulf %18, %21 : vector<16x128xf32>
    %23 = math.erf %22 : vector<16x128xf32>
    %cst_15 = arith.constant 1.000000e+00 : f32
    %24 = vector.broadcast %cst_15 : f32 to vector<16x128xf32>
    %25 = arith.addf %24, %23 : vector<16x128xf32>
    %26 = arith.mulf %20, %25 : vector<16x128xf32>
    %c0_16 = arith.constant 0 : index
    %c0_17 = arith.constant 0 : index
    %27 = vector.load %arg6[%c0_16, %c0_17] : memref<128x128xf32, #tpu.memory_space<vmem>>, vector<128x128xf32>
    %cst_18 = arith.constant dense<0.000000e+00> : vector<16x128xf32>
    %28 = tpu.matmul %26, %27, %cst_18 {dimension_numbers = #tpu.dot_dimension_numbers<[1], [0], [0], [1], [0, 0, 1, 1], [], []>} : vector<16x128xf32>, vector<128x128xf32>, vector<16x128xf32> -> vector<16x128xf32>
    %c0_19 = arith.constant 0 : index
    %c0_20 = arith.constant 0 : index
    %29 = vector.load %arg7[%c0_19, %c0_20] : memref<1x128xf32, #tpu.memory_space<vmem>>, vector<1x128xf32>
    %30 = vector.broadcast %29 : vector<1x128xf32> to vector<16x128xf32>
    %31 = arith.addf %28, %30 : vector<16x128xf32>
    %c0_21 = arith.constant 0 : index
    %c0_22 = arith.constant 0 : index
    %32 = vector.load %arg8[%c0_21, %c0_22] : memref<16x128xf32, #tpu.memory_space<vmem>>, vector<16x128xf32>
    tpu.vector_store %arg8[%c0_21, %c0_22], %31 {strides = array<i32>} : memref<16x128xf32, #tpu.memory_space<vmem>>, vector<16x128xf32>,
    return
  }
  func.func @transform_0(%arg0: i32) -> (i32, i32) {
    %c0_i32 = arith.constant 0 : i32
    %c0_i32_0 = arith.constant 0 : i32
    return %arg0, %c0_i32 : i32, i32
  }
  func.func @transform_1(%arg0: i32) -> (i32, i32) {
    %c0_i32 = arith.constant 0 : i32
    %c0_i32_0 = arith.constant 0 : i32
    %c0_i32_1 = arith.constant 0 : i32
    return %c0_i32, %c0_i32_0 : i32, i32
  }
  func.func @transform_2(%arg0: i32) -> (i32, i32) {
    %c0_i32 = arith.constant 0 : i32
    %c0_i32_0 = arith.constant 0 : i32
    %c0_i32_1 = arith.constant 0 : i32
    return %c0_i32, %c0_i32_0 : i32, i32
  }
  func.func @transform_3(%arg0: i32) -> (i32, i32) {
    %c0_i32 = arith.constant 0 : i32
    %c0_i32_0 = arith.constant 0 : i32
    %c0_i32_1 = arith.constant 0 : i32
    return %c0_i32, %c0_i32_0 : i32, i32
  }
  func.func @transform_4(%arg0: i32) -> (i32, i32) {
    %c0_i32 = arith.constant 0 : i32
    %c0_i32_0 = arith.constant 0 : i32
    %c0_i32_1 = arith.constant 0 : i32
    return %c0_i32, %c0_i32_0 : i32, i32
  }
  func.func @transform_5(%arg0: i32) -> (i32, i32) {
    %c0_i32 = arith.constant 0 : i32
    %c0_i32_0 = arith.constant 0 : i32
    %c0_i32_1 = arith.constant 0 : i32
    return %c0_i32, %c0_i32_0 : i32, i32
  }
  func.func @transform_6(%arg0: i32) -> (i32, i32) {
    %c0_i32 = arith.constant 0 : i32
    %c0_i32_0 = arith.constant 0 : i32
    %c0_i32_1 = arith.constant 0 : i32
    return %c0_i32, %c0_i32_0 : i32, i32
  }
  func.func @transform_7(%arg0: i32) -> (i32, i32) {
    %c0_i32 = arith.constant 0 : i32
    %c0_i32_0 = arith.constant 0 : i32
    return %arg0, %c0_i32 : i32, i32
  }
}

</mosaic_0001>

<llo_original>
// kernel: tpu_custom_call.1
$region0: #{tpu_custom_call.1}
  #allocation0 [shape = 'u32[]', space=smem, size = 0x4, offset = 0x4, fixed_abs, tag = 'smem constant byte address 0x4 - core index']
  #allocation1 [shape = 'u32[144,128]{1,0:T(1,128)}', space=vmem, size = 0x12000, scoped, tag = 'internal scratch']
  %s0 = inlined_call_operand.hbm [shape: f32[16,128], index: 0, kind: input, shape index: {}]
  %s1 = inlined_call_operand.hbm [shape: f32[128,128], index: 1, kind: input, shape index: {}]
  %s2 = inlined_call_operand.vmem [shape: f32[1,128], index: 2, kind: input, shape index: {}]
  %s3 = inlined_call_operand.hbm [shape: f32[128,128], index: 3, kind: input, shape index: {}]
  %s4 = inlined_call_operand.vmem [shape: f32[1,128], index: 4, kind: input, shape index: {}]
  %s5 = inlined_call_operand.hbm [shape: f32[128,128], index: 5, kind: input, shape index: {}]
  %s6 = inlined_call_operand.vmem [shape: f32[1,128], index: 6, kind: input, shape index: {}]
  %s7 = inlined_call_operand.hbm [shape: f32[16,128], index: 7, kind: output, shape index: {}]
  %s8 = sld [smem:[#allocation0]]
  $region54: #{tpu_custom_call.1} parent=0
    _
  %s10 = ssub.s32 1, %s8
  %s11 = scalar_select 0, %s10, %s8
  $region1: #{tpu_custom_call.1} parent=0
    #allocation2 [shape = 'u8[8192]{0}', space=vmem, size = 0x2000, scoped, tag = 'input window, operand 0, single buffered']
    #allocation3 [shape = 's32[1]{0}', space=sflag, size = 0x4, scoped, tag = 'scoped memory for tpu_custom_call.1']
    #allocation4 [shape = 's32[1]{0}', space=sflag, size = 0x4, scoped, tag = 'scoped memory for tpu_custom_call.1']
    #allocation5 [shape = 'u8[65536]{0}', space=vmem, size = 0x10000, scoped, tag = 'input window, operand 1, single buffered']
    #allocation6 [shape = 's32[1]{0}', space=sflag, size = 0x4, scoped, tag = 'scoped memory for tpu_custom_call.1']
    #allocation7 [shape = 'u8[65536]{0}', space=vmem, size = 0x10000, scoped, tag = 'input window, operand 3, single buffered']
    #allocation8 [shape = 'u8[65536]{0}', space=vmem, size = 0x10000, scoped, tag = 'input window, operand 5, single buffered']
    #allocation9 [shape = 's32[1]{0}', space=sflag, size = 0x4, scoped, tag = 'scoped memory for tpu_custom_call.1']
    #allocation10 [shape = 'u8[8192]{0}', space=vmem, size = 0x2000, scoped, tag = 'output window, operand 0, single buffered']
    %12 = vsyncpa [#allocation3], 0
    %13 = vsyncpa [#allocation6], 0
    %14 = vsyncpa [#allocation9], 0
    %15 = vsyncpa [#allocation4], 0
    // Predicated region
    $region2: #{tpu_custom_call.1} parent=1 // pred_check
      _
    $region3: #{tpu_custom_call.1} parent=1 // pred_check_branch
      %17 = sbr.rel (0) target = $region5
    $region4: #{tpu_custom_call.1} parent=1 // pred_region
      %s19 = ssub.s32 256, 256
      %20 = vsyncadd [#allocation3], %s19
      %s21 = sshll.u32 [#allocation2], 4
      %s22 = int_to_ptr.vmem [resolvable:$true] %s21
      %27 = dma.hbm_to_vmem [thread:$0]  %s0, 256, %s22, [#allocation3], 128, 128, 8
    $region5: #{tpu_custom_call.1} parent=1 // pred_fallthru
      _
    // Predicated region
    $region6: #{tpu_custom_call.1} parent=1 // pred_check
      _
    $region7: #{tpu_custom_call.1} parent=1 // pred_check_branch
      %29 = sbr.rel (0) target = $region9
    $region8: #{tpu_custom_call.1} parent=1 // pred_region
      %s31 = ssub.s32 2048, 2048
      %32 = vsyncadd [#allocation6], %s31
      %s33 = sshll.u32 [#allocation5], 4
      %s34 = int_to_ptr.vmem [resolvable:$true] %s33
      %39 = dma.hbm_to_vmem [thread:$0]  %s1, 2048, %s34, [#allocation6], 128, 128, 8
    $region9: #{tpu_custom_call.1} parent=1 // pred_fallthru
      _
    // Predicated region
    $region10: #{tpu_custom_call.1} parent=1 // pred_check
      _
    $region11: #{tpu_custom_call.1} parent=1 // pred_check_branch
      %41 = sbr.rel (0) target = $region13
    $region12: #{tpu_custom_call.1} parent=1 // pred_region
      _
    $region13: #{tpu_custom_call.1} parent=1 // pred_fallthru
      _
    // Predicated region
    $region14: #{tpu_custom_call.1} parent=1 // pred_check
      _
    $region15: #{tpu_custom_call.1} parent=1 // pred_check_branch
      %43 = sbr.rel (0) target = $region17
    $region16: #{tpu_custom_call.1} parent=1 // pred_region
      %s45 = ssub.s32 2048, 2048
      %46 = vsyncadd [#allocation6], %s45
      %s47 = sshll.u32 [#allocation7], 4
      %s48 = int_to_ptr.vmem [resolvable:$true] %s47
      %53 = dma.hbm_to_vmem [thread:$0]  %s3, 2048, %s48, [#allocation6], 128, 128, 8
    $region17: #{tpu_custom_call.1} parent=1 // pred_fallthru
      _
    // Predicated region
    $region18: #{tpu_custom_call.1} parent=1 // pred_check
      _
    $region19: #{tpu_custom_call.1} parent=1 // pred_check_branch
      %55 = sbr.rel (0) target = $region21
    $region20: #{tpu_custom_call.1} parent=1 // pred_region
      _
    $region21: #{tpu_custom_call.1} parent=1 // pred_fallthru
      _
    // Predicated region
    $region22: #{tpu_custom_call.1} parent=1 // pred_check
      _
    $region23: #{tpu_custom_call.1} parent=1 // pred_check_branch
      %57 = sbr.rel (0) target = $region25
    $region24: #{tpu_custom_call.1} parent=1 // pred_region
      %s59 = ssub.s32 2048, 2048
      %60 = vsyncadd [#allocation9], %s59
      %s61 = sshll.u32 [#allocation8], 4
      %s62 = int_to_ptr.vmem [resolvable:$true] %s61
      %67 = dma.hbm_to_vmem [thread:$0]  %s5, 2048, %s62, [#allocation9], 128, 128, 8
    $region25: #{tpu_custom_call.1} parent=1 // pred_fallthru
      _
    // Predicated region
    $region26: #{tpu_custom_call.1} parent=1 // pred_check
      _
    $region27: #{tpu_custom_call.1} parent=1 // pred_check_branch
      %69 = sbr.rel (0) target = $region29
    $region28: #{tpu_custom_call.1} parent=1 // pred_region
      _
    $region29: #{tpu_custom_call.1} parent=1 // pred_fallthru
      _
    // Predicated region
    $region30: #{tpu_custom_call.1} parent=1 // pred_check
      _
    $region31: #{tpu_custom_call.1} parent=1 // pred_check_branch
      %71 = sbr.rel (0) target = $region33
    $region32: #{tpu_custom_call.1} parent=1 // pred_region
      %72 = dma.done [#allocation3], 256
    $region33: #{tpu_custom_call.1} parent=1 // pred_fallthru
      _
    // Predicated region
    $region34: #{tpu_custom_call.1} parent=1 // pred_check
      _
    $region35: #{tpu_custom_call.1} parent=1 // pred_check_branch
      %74 = sbr.rel (0) target = $region37
    $region36: #{tpu_custom_call.1} parent=1 // pred_region
      %75 = dma.done [#allocation6], 2048
    $region37: #{tpu_custom_call.1} parent=1 // pred_fallthru
      _
    // Predicated region
    $region38: #{tpu_custom_call.1} parent=1 // pred_check
      _
    $region39: #{tpu_custom_call.1} parent=1 // pred_check_branch
      %77 = sbr.rel (0) target = $region41
    $region40: #{tpu_custom_call.1} parent=1 // pred_region
      %78 = dma.done [#allocation6], 2048
    $region41: #{tpu_custom_call.1} parent=1 // pred_fallthru
      _
    // Predicated region
    $region42: #{tpu_custom_call.1} parent=1 // pred_check
      _
    $region43: #{tpu_custom_call.1} parent=1 // pred_check_branch
      %80 = sbr.rel (0) target = $region45
    $region44: #{tpu_custom_call.1} parent=1 // pred_region
      %81 = dma.done [#allocation9], 2048
    $region45: #{tpu_custom_call.1} parent=1 // pred_fallthru
      _
    %v82 = vld [vmem:[#allocation2] sm:$0xff]
    %v83 = vld [vmem:[#allocation2 + $0x8] sm:$0xff]
    %v84 = vld [vmem:[#allocation5] sm:$0xff]
    %v85 = vld [vmem:[#allocation5 + $0x8] sm:$0xff]
    %v86 = vld [vmem:[#allocation5 + $0x10] sm:$0xff]
    %v87 = vld [vmem:[#allocation5 + $0x18] sm:$0xff]
    %v88 = vld [vmem:[#allocation5 + $0x20] sm:$0xff]
    %v89 = vld [vmem:[#allocation5 + $0x28] sm:$0xff]
    %v90 = vld [vmem:[#allocation5 + $0x30] sm:$0xff]
    %v91 = vld [vmem:[#allocation5 + $0x38] sm:$0xff]
    %v92 = vld [vmem:[#allocation5 + $0x40] sm:$0xff]
    %v93 = vld [vmem:[#allocation5 + $0x48] sm:$0xff]
    %v94 = vld [vmem:[#allocation5 + $0x50] sm:$0xff]
    %v95 = vld [vmem:[#allocation5 + $0x58] sm:$0xff]
    %v96 = vld [vmem:[#allocation5 + $0x60] sm:$0xff]
    %v97 = vld [vmem:[#allocation5 + $0x68] sm:$0xff]
    %v98 = vld [vmem:[#allocation5 + $0x70] sm:$0xff]
    %v99 = vld [vmem:[#allocation5 + $0x78] sm:$0xff]
    %v100 = vld [vmem:[%s2] sm:$0x1]
    %v102 = vlaneseq
    %v103 = vshrl.u32 %v102, 7
    %v104 = vsub.s32 0, %v103
    %v105 = vrot.slane %v100, %v104
    %107 = vmatprep.subr.mxu0 0.0
    %108 = vmatpush1.msra.mxu0 %v84
    %109 = vmatprep.subr.mxu0 0.0
    %110 = vmatpush1.msra.mxu0 %v85
    %111 = vmatprep.subr.mxu0 0.0
    %112 = vmatpush1.msra.mxu0 %v86
    %113 = vmatprep.subr.mxu0 0.0
    %114 = vmatpush1.msra.mxu0 %v87
    %115 = vmatprep.subr.mxu0 0.0
    %116 = vmatpush1.msra.mxu0 %v88
    %117 = vmatprep.subr.mxu0 0.0
    %118 = vmatpush1.msra.mxu0 %v89
    %119 = vmatprep.subr.mxu0 0.0
    %120 = vmatpush1.msra.mxu0 %v90
    %121 = vmatprep.subr.mxu0 0.0
    %122 = vmatpush1.msra.mxu0 %v91
    %123 = vmatprep.subr.mxu0 0.0
    %124 = vmatpush1.msra.mxu0 %v92
    %125 = vmatprep.subr.mxu0 0.0
    %126 = vmatpush1.msra.mxu0 %v93
    %127 = vmatprep.subr.mxu0 0.0
    %128 = vmatpush1.msra.mxu0 %v94
    %129 = vmatprep.subr.mxu0 0.0
    %130 = vmatpush1.msra.mxu0 %v95
    %131 = vmatprep.subr.mxu0 0.0
    %132 = vmatpush1.msra.mxu0 %v96
    %133 = vmatprep.subr.mxu0 0.0
    %134 = vmatpush1.msra.mxu0 %v97
    %135 = vmatprep.subr.mxu0 0.0
    %136 = vmatpush1.msra.mxu0 %v98
    %137 = vmatprep.subr.mxu0 0.0
    %138 = vmatpush1.msra.mxu0 %v99
    %139 = vmatprep.subr.mxu0 0.0
    %140 = vmatpush1.msra.mxu0 0.0
    %141 = vmatprep.subr.mxu0 0.0
    %142 = vmatpush1.msra.mxu0 0.0
    %143 = vmatprep.subr.mxu0 0.0
    %144 = vmatpush1.msra.mxu0 0.0
    %145 = vmatprep.subr.mxu0 0.0
    %146 = vmatpush1.msra.mxu0 0.0
    %147 = vmatprep.subr.mxu0 0.0
    %148 = vmatpush1.msra.mxu0 0.0
    %149 = vmatprep.subr.mxu0 0.0
    %150 = vmatpush1.msra.mxu0 0.0
    %151 = vmatprep.subr.mxu0 0.0
    %152 = vmatpush1.msra.mxu0 0.0
    %153 = vmatprep.subr.mxu0 0.0
    %154 = vmatpush1.msra.mxu0 0.0
    %155 = vmatprep.subr.mxu0 0.0
    %156 = vmatpush1.msra.mxu0 0.0
    %157 = vmatprep.subr.mxu0 0.0
    %158 = vmatpush1.msra.mxu0 0.0
    %159 = vmatprep.subr.mxu0 0.0
    %160 = vmatpush1.msra.mxu0 0.0
    %161 = vmatprep.subr.mxu0 0.0
    %162 = vmatpush1.msra.mxu0 0.0
    %163 = vmatprep.subr.mxu0 0.0
    %164 = vmatpush1.msra.mxu0 0.0
    %165 = vmatprep.subr.mxu0 0.0
    %166 = vmatpush1.msra.mxu0 0.0
    %167 = vmatprep.subr.mxu0 0.0
    %168 = vmatpush1.msra.mxu0 0.0
    %169 = vmatprep.subr.mxu0 0.0
    %170 = vmatpush1.msra.mxu0 0.0
    %171 = vmatprep.mubr.f32.mxu0 0.0
    %172 = vmatmul.mubr.f32.gmra.mrb[0].mxu0 %v82
    %v173 = vpop.f32.mrb[0].mxu0
    %v174 = vadd.f32 %v105, %v173
    %v175 = vpop.f32.mrb[0].mxu0
    %176 = vmatprep.mubr.f32.mxu0 0.0
    %177 = vmatmul.mubr.f32.gmra.mrb[0].mxu0 %v83
    %v178 = vpop.f32.mrb[0].mxu0
    %v179 = vadd.f32 %v105, %v178
    %v180 = vpop.f32.mrb[0].mxu0
    %181 = vdwg.mxu0
    %v182 = vmul.f32 %v174, 0.5
    %v183 = vmul.f32 %v179, 0.5
    %v184 = vmul.f32 %v174, 0.70710677
    %v185 = vmul.f32 %v179, 0.70710677
    %v186 = verf.f32.pop %v184
    %v187 = verf.f32.pop %v185
    %v188 = vadd.f32 %v186, 1.0
    %v189 = vadd.f32 %v187, 1.0
    %v190 = vmul.f32 %v182, %v188
    %v191 = vmul.f32 %v183, %v189
    %v192 = vld [vmem:[#allocation7] sm:$0xff]
    %v193 = vld [vmem:[#allocation7 + $0x8] sm:$0xff]
    %v194 = vld [vmem:[#allocation7 + $0x10] sm:$0xff]
    %v195 = vld [vmem:[#allocation7 + $0x18] sm:$0xff]
    %v196 = vld [vmem:[#allocation7 + $0x20] sm:$0xff]
    %v197 = vld [vmem:[#allocation7 + $0x28] sm:$0xff]
    %v198 = vld [vmem:[#allocation7 + $0x30] sm:$0xff]
    %v199 = vld [vmem:[#allocation7 + $0x38] sm:$0xff]
    %v200 = vld [vmem:[#allocation7 + $0x40] sm:$0xff]
    %v201 = vld [vmem:[#allocation7 + $0x48] sm:$0xff]
    %v202 = vld [vmem:[#allocation7 + $0x50] sm:$0xff]
    %v203 = vld [vmem:[#allocation7 + $0x58] sm:$0xff]
    %v204 = vld [vmem:[#allocation7 + $0x60] sm:$0xff]
    %v205 = vld [vmem:[#allocation7 + $0x68] sm:$0xff]
    %v206 = vld [vmem:[#allocation7 + $0x70] sm:$0xff]
    %v207 = vld [vmem:[#allocation7 + $0x78] sm:$0xff]
    %v208 = vld [vmem:[%s4] sm:$0x1]
    %v210 = vlaneseq
    %v211 = vshrl.u32 %v210, 7
    %v212 = vsub.s32 0, %v211
    %v213 = vrot.slane %v208, %v212
    %215 = vmatprep.subr.mxu0 0.0
    %216 = vmatpush1.msra.mxu0 %v192
    %217 = vmatprep.subr.mxu0 0.0
    %218 = vmatpush1.msra.mxu0 %v193
    %219 = vmatprep.subr.mxu0 0.0
    %220 = vmatpush1.msra.mxu0 %v194
    %221 = vmatprep.subr.mxu0 0.0
    %222 = vmatpush1.msra.mxu0 %v195
    %223 = vmatprep.subr.mxu0 0.0
    %224 = vmatpush1.msra.mxu0 %v196
    %225 = vmatprep.subr.mxu0 0.0
    %226 = vmatpush1.msra.mxu0 %v197
    %227 = vmatprep.subr.mxu0 0.0
    %228 = vmatpush1.msra.mxu0 %v198
    %229 = vmatprep.subr.mxu0 0.0
    %230 = vmatpush1.msra.mxu0 %v199
    %231 = vmatprep.subr.mxu0 0.0
    %232 = vmatpush1.msra.mxu0 %v200
    %233 = vmatprep.subr.mxu0 0.0
    %234 = vmatpush1.msra.mxu0 %v201
    %235 = vmatprep.subr.mxu0 0.0
    %236 = vmatpush1.msra.mxu0 %v202
    %237 = vmatprep.subr.mxu0 0.0
    %238 = vmatpush1.msra.mxu0 %v203
    %239 = vmatprep.subr.mxu0 0.0
    %240 = vmatpush1.msra.mxu0 %v204
    %241 = vmatprep.subr.mxu0 0.0
    %242 = vmatpush1.msra.mxu0 %v205
    %243 = vmatprep.subr.mxu0 0.0
    %244 = vmatpush1.msra.mxu0 %v206
    %245 = vmatprep.subr.mxu0 0.0
    %246 = vmatpush1.msra.mxu0 %v207
    %247 = vmatprep.subr.mxu0 0.0
    %248 = vmatpush1.msra.mxu0 0.0
    %249 = vmatprep.subr.mxu0 0.0
    %250 = vmatpush1.msra.mxu0 0.0
    %251 = vmatprep.subr.mxu0 0.0
    %252 = vmatpush1.msra.mxu0 0.0
    %253 = vmatprep.subr.mxu0 0.0
    %254 = vmatpush1.msra.mxu0 0.0
    %255 = vmatprep.subr.mxu0 0.0
    %256 = vmatpush1.msra.mxu0 0.0
    %257 = vmatprep.subr.mxu0 0.0
    %258 = vmatpush1.msra.mxu0 0.0
    %259 = vmatprep.subr.mxu0 0.0
    %260 = vmatpush1.msra.mxu0 0.0
    %261 = vmatprep.subr.mxu0 0.0
    %262 = vmatpush1.msra.mxu0 0.0
    %263 = vmatprep.subr.mxu0 0.0
    %264 = vmatpush1.msra.mxu0 0.0
    %265 = vmatprep.subr.mxu0 0.0
    %266 = vmatpush1.msra.mxu0 0.0
    %267 = vmatprep.subr.mxu0 0.0
    %268 = vmatpush1.msra.mxu0 0.0
    %269 = vmatprep.subr.mxu0 0.0
    %270 = vmatpush1.msra.mxu0 0.0
    %271 = vmatprep.subr.mxu0 0.0
    %272 = vmatpush1.msra.mxu0 0.0
    %273 = vmatprep.subr.mxu0 0.0
    %274 = vmatpush1.msra.mxu0 0.0
    %275 = vmatprep.subr.mxu0 0.0
    %276 = vmatpush1.msra.mxu0 0.0
    %277 = vmatprep.subr.mxu0 0.0
    %278 = vmatpush1.msra.mxu0 0.0
    %279 = vmatprep.mubr.f32.mxu0 0.0
    %280 = vmatmul.mubr.f32.gmra.mrb[0].mxu0 %v190
    %v281 = vpop.f32.mrb[0].mxu0
    %v282 = vadd.f32 %v213, %v281
    %v283 = vpop.f32.mrb[0].mxu0
    %284 = vmatprep.mubr.f32.mxu0 0.0
    %285 = vmatmul.mubr.f32.gmra.mrb[0].mxu0 %v191
    %v286 = vpop.f32.mrb[0].mxu0
    %v287 = vadd.f32 %v213, %v286
    %v288 = vpop.f32.mrb[0].mxu0
    %289 = vdwg.mxu0
    %v290 = vmul.f32 %v282, 0.5
    %v291 = vmul.f32 %v287, 0.5
    %v292 = vmul.f32 %v282, 0.70710677
    %v293 = vmul.f32 %v287, 0.70710677
    %v294 = verf.f32.pop %v292
    %v295 = verf.f32.pop %v293
    %v296 = vadd.f32 %v294, 1.0
    %v297 = vadd.f32 %v295, 1.0
    %v298 = vmul.f32 %v290, %v296
    %v299 = vmul.f32 %v291, %v297
    %v300 = vld [vmem:[#allocation8] sm:$0xff]
    %v301 = vld [vmem:[#allocation8 + $0x8] sm:$0xff]
    %v302 = vld [vmem:[#allocation8 + $0x10] sm:$0xff]
    %v303 = vld [vmem:[#allocation8 + $0x18] sm:$0xff]
    %v304 = vld [vmem:[#allocation8 + $0x20] sm:$0xff]
    %v305 = vld [vmem:[#allocation8 + $0x28] sm:$0xff]
    %v306 = vld [vmem:[#allocation8 + $0x30] sm:$0xff]
    %v307 = vld [vmem:[#allocation8 + $0x38] sm:$0xff]
    %v308 = vld [vmem:[#allocation8 + $0x40] sm:$0xff]
    %v309 = vld [vmem:[#allocation8 + $0x48] sm:$0xff]
    %v310 = vld [vmem:[#allocation8 + $0x50] sm:$0xff]
    %v311 = vld [vmem:[#allocation8 + $0x58] sm:$0xff]
    %v312 = vld [vmem:[#allocation8 + $0x60] sm:$0xff]
    %v313 = vld [vmem:[#allocation8 + $0x68] sm:$0xff]
    %v314 = vld [vmem:[#allocation8 + $0x70] sm:$0xff]
    %v315 = vld [vmem:[#allocation8 + $0x78] sm:$0xff]
    %v316 = vld [vmem:[%s6] sm:$0x1]
    %v318 = vlaneseq
    %v319 = vshrl.u32 %v318, 7
    %v320 = vsub.s32 0, %v319
    %v321 = vrot.slane %v316, %v320
    %323 = vmatprep.subr.mxu0 0.0
    %324 = vmatpush1.msra.mxu0 %v300
    %325 = vmatprep.subr.mxu0 0.0
    %326 = vmatpush1.msra.mxu0 %v301
    %327 = vmatprep.subr.mxu0 0.0
    %328 = vmatpush1.msra.mxu0 %v302
    %329 = vmatprep.subr.mxu0 0.0
    %330 = vmatpush1.msra.mxu0 %v303
    %331 = vmatprep.subr.mxu0 0.0
    %332 = vmatpush1.msra.mxu0 %v304
    %333 = vmatprep.subr.mxu0 0.0
    %334 = vmatpush1.msra.mxu0 %v305
    %335 = vmatprep.subr.mxu0 0.0
    %336 = vmatpush1.msra.mxu0 %v306
    %337 = vmatprep.subr.mxu0 0.0
    %338 = vmatpush1.msra.mxu0 %v307
    %339 = vmatprep.subr.mxu0 0.0
    %340 = vmatpush1.msra.mxu0 %v308
    %341 = vmatprep.subr.mxu0 0.0
    %342 = vmatpush1.msra.mxu0 %v309
    %343 = vmatprep.subr.mxu0 0.0
    %344 = vmatpush1.msra.mxu0 %v310
    %345 = vmatprep.subr.mxu0 0.0
    %346 = vmatpush1.msra.mxu0 %v311
    %347 = vmatprep.subr.mxu0 0.0
    %348 = vmatpush1.msra.mxu0 %v312
    %349 = vmatprep.subr.mxu0 0.0
    %350 = vmatpush1.msra.mxu0 %v313
    %351 = vmatprep.subr.mxu0 0.0
    %352 = vmatpush1.msra.mxu0 %v314
    %353 = vmatprep.subr.mxu0 0.0
    %354 = vmatpush1.msra.mxu0 %v315
    %355 = vmatprep.subr.mxu0 0.0
    %356 = vmatpush1.msra.mxu0 0.0
    %357 = vmatprep.subr.mxu0 0.0
    %358 = vmatpush1.msra.mxu0 0.0
    %359 = vmatprep.subr.mxu0 0.0
    %360 = vmatpush1.msra.mxu0 0.0
    %361 = vmatprep.subr.mxu0 0.0
    %362 = vmatpush1.msra.mxu0 0.0
    %363 = vmatprep.subr.mxu0 0.0
    %364 = vmatpush1.msra.mxu0 0.0
    %365 = vmatprep.subr.mxu0 0.0
    %366 = vmatpush1.msra.mxu0 0.0
    %367 = vmatprep.subr.mxu0 0.0
    %368 = vmatpush1.msra.mxu0 0.0
    %369 = vmatprep.subr.mxu0 0.0
    %370 = vmatpush1.msra.mxu0 0.0
    %371 = vmatprep.subr.mxu0 0.0
    %372 = vmatpush1.msra.mxu0 0.0
    %373 = vmatprep.subr.mxu0 0.0
    %374 = vmatpush1.msra.mxu0 0.0
    %375 = vmatprep.subr.mxu0 0.0
    %376 = vmatpush1.msra.mxu0 0.0
    %377 = vmatprep.subr.mxu0 0.0
    %378 = vmatpush1.msra.mxu0 0.0
    %379 = vmatprep.subr.mxu0 0.0
    %380 = vmatpush1.msra.mxu0 0.0
    %381 = vmatprep.subr.mxu0 0.0
    %382 = vmatpush1.msra.mxu0 0.0
    %383 = vmatprep.subr.mxu0 0.0
    %384 = vmatpush1.msra.mxu0 0.0
    %385 = vmatprep.subr.mxu0 0.0
    %386 = vmatpush1.msra.mxu0 0.0
    %387 = vmatprep.mubr.f32.mxu0 0.0
    %388 = vmatmul.mubr.f32.gmra.mrb[0].mxu0 %v298
    %v389 = vpop.f32.mrb[0].mxu0
    %v390 = vadd.f32 %v321, %v389
    %v391 = vpop.f32.mrb[0].mxu0
    %392 = vmatprep.mubr.f32.mxu0 0.0
    %393 = vmatmul.mubr.f32.gmra.mrb[0].mxu0 %v299
    %v394 = vpop.f32.mrb[0].mxu0
    %v395 = vadd.f32 %v321, %v394
    %v396 = vpop.f32.mrb[0].mxu0
    %397 = vdwg.mxu0
    %398 = vst [vmem:[#allocation10] sm:$0xff] %v390
    %399 = vst [vmem:[#allocation10 + $0x8] sm:$0xff] %v395
    // Predicated region
    $region46: #{tpu_custom_call.1} parent=1 // pred_check
      _
    $region47: #{tpu_custom_call.1} parent=1 // pred_check_branch
      %401 = sbr.rel (0) target = $region49
    $region48: #{tpu_custom_call.1} parent=1 // pred_region
      %s403 = ssub.s32 256, 256
      %404 = vsyncadd [#allocation4], %s403
      %s405 = sshll.u32 [#allocation10], 4
      %s406 = int_to_ptr.vmem [resolvable:$true] %s405
      %411 = dma.vmem_to_hbm [thread:$0]  %s406, 256, %s7, [#allocation4], 128, 128, 8
    $region49: #{tpu_custom_call.1} parent=1 // pred_fallthru
      _
    // Predicated region
    $region50: #{tpu_custom_call.1} parent=1 // pred_check
      _
    $region51: #{tpu_custom_call.1} parent=1 // pred_check_branch
      %413 = sbr.rel (0) target = $region53
    $region52: #{tpu_custom_call.1} parent=1 // pred_region
      %414 = dma.done [#allocation4], 256
    $region53: #{tpu_custom_call.1} parent=1 // pred_fallthru
      _
    %415 = vsyncpa [#allocation3], 1
    %416 = vsyncpa [#allocation6], 1
    %417 = vsyncpa [#allocation9], 1
    %418 = vsyncpa [#allocation4], 1

// kernel: tpu_custom_call.1
$region0: #{tpu_custom_call.1}
  #allocation0 [shape = 'u32[]', space=smem, size = 0x4, offset = 0x4, fixed_abs, tag = 'smem constant byte address 0x4 - core index']
  #allocation1 [shape = 'u32[144,128]{1,0:T(1,128)}', space=vmem, size = 0x12000, scoped, tag = 'internal scratch']
  %s0 = inlined_call_operand.hbm [shape: f32[16,128], index: 0, kind: input, shape index: {}]
  %s1 = inlined_call_operand.hbm [shape: f32[128,128], index: 1, kind: input, shape index: {}]
  %s2 = inlined_call_operand.vmem [shape: f32[1,128], index: 2, kind: input, shape index: {}]
  %s3 = inlined_call_operand.hbm [shape: f32[128,128], index: 3, kind: input, shape index: {}]
  %s4 = inlined_call_operand.vmem [shape: f32[1,128], index: 4, kind: input, shape index: {}]
  %s5 = inlined_call_operand.hbm [shape: f32[128,128], index: 5, kind: input, shape index: {}]
  %s6 = inlined_call_operand.vmem [shape: f32[1,128], index: 6, kind: input, shape index: {}]
  %s7 = inlined_call_operand.hbm [shape: f32[16,128], index: 7, kind: output, shape index: {}]
  %s8 = sld [smem:[#allocation0]]
  $region54: #{tpu_custom_call.1} parent=0
    _
  %s10 = ssub.s32 1, %s8
  %s11 = scalar_select 0, %s10, %s8
  $region1: #{tpu_custom_call.1} parent=0
    #allocation2 [shape = 'u8[8192]{0}', space=vmem, size = 0x2000, scoped, tag = 'input window, operand 0, single buffered']
    #allocation3 [shape = 's32[1]{0}', space=sflag, size = 0x4, scoped, tag = 'scoped memory for tpu_custom_call.1']
    #allocation4 [shape = 's32[1]{0}', space=sflag, size = 0x4, scoped, tag = 'scoped memory for tpu_custom_call.1']
    #allocation5 [shape = 'u8[65536]{0}', space=vmem, size = 0x10000, scoped, tag = 'input window, operand 1, single buffered']
    #allocation6 [shape = 's32[1]{0}', space=sflag, size = 0x4, scoped, tag = 'scoped memory for tpu_custom_call.1']
    #allocation7 [shape = 'u8[65536]{0}', space=vmem, size = 0x10000, scoped, tag = 'input window, operand 3, single buffered']
    #allocation8 [shape = 'u8[65536]{0}', space=vmem, size = 0x10000, scoped, tag = 'input window, operand 5, single buffered']
    #allocation9 [shape = 's32[1]{0}', space=sflag, size = 0x4, scoped, tag = 'scoped memory for tpu_custom_call.1']
    #allocation10 [shape = 'u8[8192]{0}', space=vmem, size = 0x2000, scoped, tag = 'output window, operand 0, single buffered']
    %12 = vsyncpa [#allocation3], 0
    %13 = vsyncpa [#allocation6], 0
    %14 = vsyncpa [#allocation9], 0
    %15 = vsyncpa [#allocation4], 0
    // Predicated region
    $region2: #{tpu_custom_call.1} parent=1 // pred_check
      _
    $region3: #{tpu_custom_call.1} parent=1 // pred_check_branch
      %17 = sbr.rel (0) target = $region5
    $region4: #{tpu_custom_call.1} parent=1 // pred_region
      %s19 = ssub.s32 256, 256
      %20 = vsyncadd [#allocation3], %s19
      %s21 = sshll.u32 [#allocation2], 4
      %s22 = int_to_ptr.vmem [resolvable:$true] %s21
      %27 = dma.hbm_to_vmem [thread:$0]  %s0, 256, %s22, [#allocation3], 128, 128, 8
    $region5: #{tpu_custom_call.1} parent=1 // pred_fallthru
      _
    // Predicated region
    $region6: #{tpu_custom_call.1} parent=1 // pred_check
      _
    $region7: #{tpu_custom_call.1} parent=1 // pred_check_branch
      %29 = sbr.rel (0) target = $region9
    $region8: #{tpu_custom_call.1} parent=1 // pred_region
      %s31 = ssub.s32 2048, 2048
      %32 = vsyncadd [#allocation6], %s31
      %s33 = sshll.u32 [#allocation5], 4
      %s34 = int_to_ptr.vmem [resolvable:$true] %s33
      %39 = dma.hbm_to_vmem [thread:$0]  %s1, 2048, %s34, [#allocation6], 128, 128, 8
    $region9: #{tpu_custom_call.1} parent=1 // pred_fallthru
      _
    // Predicated region
    $region10: #{tpu_custom_call.1} parent=1 // pred_check
      _
    $region11: #{tpu_custom_call.1} parent=1 // pred_check_branch
      %41 = sbr.rel (0) target = $region13
    $region12: #{tpu_custom_call.1} parent=1 // pred_region
      _
    $region13: #{tpu_custom_call.1} parent=1 // pred_fallthru
      _
    // Predicated region
    $region14: #{tpu_custom_call.1} parent=1 // pred_check
      _
    $region15: #{tpu_custom_call.1} parent=1 // pred_check_branch
      %43 = sbr.rel (0) target = $region17
    $region16: #{tpu_custom_call.1} parent=1 // pred_region
      %s45 = ssub.s32 2048, 2048
      %46 = vsyncadd [#allocation6], %s45
      %s47 = sshll.u32 [#allocation7], 4
      %s48 = int_to_ptr.vmem [resolvable:$true] %s47
      %53 = dma.hbm_to_vmem [thread:$0]  %s3, 2048, %s48, [#allocation6], 128, 128, 8
    $region17: #{tpu_custom_call.1} parent=1 // pred_fallthru
      _
    // Predicated region
    $region18: #{tpu_custom_call.1} parent=1 // pred_check
      _
    $region19: #{tpu_custom_call.1} parent=1 // pred_check_branch
      %55 = sbr.rel (0) target = $region21
    $region20: #{tpu_custom_call.1} parent=1 // pred_region
      _
    $region21: #{tpu_custom_call.1} parent=1 // pred_fallthru
      _
    // Predicated region
    $region22: #{tpu_custom_call.1} parent=1 // pred_check
      _
    $region23: #{tpu_custom_call.1} parent=1 // pred_check_branch
      %57 = sbr.rel (0) target = $region25
    $region24: #{tpu_custom_call.1} parent=1 // pred_region
      %s59 = ssub.s32 2048, 2048
      %60 = vsyncadd [#allocation9], %s59
      %s61 = sshll.u32 [#allocation8], 4
      %s62 = int_to_ptr.vmem [resolvable:$true] %s61
      %67 = dma.hbm_to_vmem [thread:$0]  %s5, 2048, %s62, [#allocation9], 128, 128, 8
    $region25: #{tpu_custom_call.1} parent=1 // pred_fallthru
      _
    // Predicated region
    $region26: #{tpu_custom_call.1} parent=1 // pred_check
      _
    $region27: #{tpu_custom_call.1} parent=1 // pred_check_branch
      %69 = sbr.rel (0) target = $region29
    $region28: #{tpu_custom_call.1} parent=1 // pred_region
      _
    $region29: #{tpu_custom_call.1} parent=1 // pred_fallthru
      _
    // Predicated region
    $region30: #{tpu_custom_call.1} parent=1 // pred_check
      _
    $region31: #{tpu_custom_call.1} parent=1 // pred_check_branch
      %71 = sbr.rel (0) target = $region33
    $region32: #{tpu_custom_call.1} parent=1 // pred_region
      %72 = dma.done [#allocation3], 256
    $region33: #{tpu_custom_call.1} parent=1 // pred_fallthru
      _
    // Predicated region
    $region34: #{tpu_custom_call.1} parent=1 // pred_check
      _
    $region35: #{tpu_custom_call.1} parent=1 // pred_check_branch
      %74 = sbr.rel (0) target = $region37
    $region36: #{tpu_custom_call.1} parent=1 // pred_region
      %75 = dma.done [#allocation6], 2048
    $region37: #{tpu_custom_call.1} parent=1 // pred_fallthru
      _
    // Predicated region
    $region38: #{tpu_custom_call.1} parent=1 // pred_check
      _
    $region39: #{tpu_custom_call.1} parent=1 // pred_check_branch
      %77 = sbr.rel (0) target = $region41
    $region40: #{tpu_custom_call.1} parent=1 // pred_region
      %78 = dma.done [#allocation6], 2048
    $region41: #{tpu_custom_call.1} parent=1 // pred_fallthru
      _
    // Predicated region
    $region42: #{tpu_custom_call.1} parent=1 // pred_check
      _
    $region43: #{tpu_custom_call.1} parent=1 // pred_check_branch
      %80 = sbr.rel (0) target = $region45
    $region44: #{tpu_custom_call.1} parent=1 // pred_region
      %81 = dma.done [#allocation9], 2048
    $region45: #{tpu_custom_call.1} parent=1 // pred_fallthru
      _
    %v82 = vld [vmem:[#allocation2] sm:$0xff]
    %v83 = vld [vmem:[#allocation2 + $0x8] sm:$0xff]
    %v84 = vld [vmem:[#allocation5] sm:$0xff]
    %v85 = vld [vmem:[#allocation5 + $0x8] sm:$0xff]
    %v86 = vld [vmem:[#allocation5 + $0x10] sm:$0xff]
    %v87 = vld [vmem:[#allocation5 + $0x18] sm:$0xff]
    %v88 = vld [vmem:[#allocation5 + $0x20] sm:$0xff]
    %v89 = vld [vmem:[#allocation5 + $0x28] sm:$0xff]
    %v90 = vld [vmem:[#allocation5 + $0x30] sm:$0xff]
    %v91 = vld [vmem:[#allocation5 + $0x38] sm:$0xff]
    %v92 = vld [vmem:[#allocation5 + $0x40] sm:$0xff]
    %v93 = vld [vmem:[#allocation5 + $0x48] sm:$0xff]
    %v94 = vld [vmem:[#allocation5 + $0x50] sm:$0xff]
    %v95 = vld [vmem:[#allocation5 + $0x58] sm:$0xff]
    %v96 = vld [vmem:[#allocation5 + $0x60] sm:$0xff]
    %v97 = vld [vmem:[#allocation5 + $0x68] sm:$0xff]
    %v98 = vld [vmem:[#allocation5 + $0x70] sm:$0xff]
    %v99 = vld [vmem:[#allocation5 + $0x78] sm:$0xff]
    %v100 = vld [vmem:[%s2] sm:$0x1]
    %v102 = vlaneseq
    %v103 = vshrl.u32 %v102, 7
    %v104 = vsub.s32 0, %v103
    %v105 = vrot.slane %v100, %v104
    %107 = vmatprep.subr.mxu0 0.0
    %108 = vmatpush1.msra.mxu0 %v84
    %109 = vmatprep.subr.mxu0 0.0
    %110 = vmatpush1.msra.mxu0 %v85
    %111 = vmatprep.subr.mxu0 0.0
    %112 = vmatpush1.msra.mxu0 %v86
    %113 = vmatprep.subr.mxu0 0.0
    %114 = vmatpush1.msra.mxu0 %v87
    %115 = vmatprep.subr.mxu0 0.0
    %116 = vmatpush1.msra.mxu0 %v88
    %117 = vmatprep.subr.mxu0 0.0
    %118 = vmatpush1.msra.mxu0 %v89
    %119 = vmatprep.subr.mxu0 0.0
    %120 = vmatpush1.msra.mxu0 %v90
    %121 = vmatprep.subr.mxu0 0.0
    %122 = vmatpush1.msra.mxu0 %v91
    %123 = vmatprep.subr.mxu0 0.0
    %124 = vmatpush1.msra.mxu0 %v92
    %125 = vmatprep.subr.mxu0 0.0
    %126 = vmatpush1.msra.mxu0 %v93
    %127 = vmatprep.subr.mxu0 0.0
    %128 = vmatpush1.msra.mxu0 %v94
    %129 = vmatprep.subr.mxu0 0.0
    %130 = vmatpush1.msra.mxu0 %v95
    %131 = vmatprep.subr.mxu0 0.0
    %132 = vmatpush1.msra.mxu0 %v96
    %133 = vmatprep.subr.mxu0 0.0
    %134 = vmatpush1.msra.mxu0 %v97
    %135 = vmatprep.subr.mxu0 0.0
    %136 = vmatpush1.msra.mxu0 %v98
    %137 = vmatprep.subr.mxu0 0.0
    %138 = vmatpush1.msra.mxu0 %v99
    %139 = vmatprep.subr.mxu0 0.0
    %140 = vmatpush1.msra.mxu0 0.0
    %141 = vmatprep.subr.mxu0 0.0
    %142 = vmatpush1.msra.mxu0 0.0
    %143 = vmatprep.subr.mxu0 0.0
    %144 = vmatpush1.msra.mxu0 0.0
    %145 = vmatprep.subr.mxu0 0.0
    %146 = vmatpush1.msra.mxu0 0.0
    %147 = vmatprep.subr.mxu0 0.0
    %148 = vmatpush1.msra.mxu0 0.0
    %149 = vmatprep.subr.mxu0 0.0
    %150 = vmatpush1.msra.mxu0 0.0
    %151 = vmatprep.subr.mxu0 0.0
    %152 = vmatpush1.msra.mxu0 0.0
    %153 = vmatprep.subr.mxu0 0.0
    %154 = vmatpush1.msra.mxu0 0.0
    %155 = vmatprep.subr.mxu0 0.0
    %156 = vmatpush1.msra.mxu0 0.0
    %157 = vmatprep.subr.mxu0 0.0
    %158 = vmatpush1.msra.mxu0 0.0
    %159 = vmatprep.subr.mxu0 0.0
    %160 = vmatpush1.msra.mxu0 0.0
    %161 = vmatprep.subr.mxu0 0.0
    %162 = vmatpush1.msra.mxu0 0.0
    %163 = vmatprep.subr.mxu0 0.0
    %164 = vmatpush1.msra.mxu0 0.0
    %165 = vmatprep.subr.mxu0 0.0
    %166 = vmatpush1.msra.mxu0 0.0
    %167 = vmatprep.subr.mxu0 0.0
    %168 = vmatpush1.msra.mxu0 0.0
    %169 = vmatprep.subr.mxu0 0.0
    %170 = vmatpush1.msra.mxu0 0.0
    %171 = vmatprep.mubr.f32.mxu0 0.0
    %172 = vmatmul.mubr.f32.gmra.mrb[0].mxu0 %v82
    %v173 = vpop.f32.mrb[0].mxu0
    %v174 = vadd.f32 %v105, %v173
    %v175 = vpop.f32.mrb[0].mxu0
    %176 = vmatprep.mubr.f32.mxu0 0.0
    %177 = vmatmul.mubr.f32.gmra.mrb[0].mxu0 %v83
    %v178 = vpop.f32.mrb[0].mxu0
    %v179 = vadd.f32 %v105, %v178
    %v180 = vpop.f32.mrb[0].mxu0
    %181 = vdwg.mxu0
    %v182 = vmul.f32 %v174, 0.5
    %v183 = vmul.f32 %v179, 0.5
    %v184 = vmul.f32 %v174, 0.70710677
    %v185 = vmul.f32 %v179, 0.70710677
    %v186 = verf.f32.pop %v184
    %v187 = verf.f32.pop %v185
    %v188 = vadd.f32 %v186, 1.0
    %v189 = vadd.f32 %v187, 1.0
    %v190 = vmul.f32 %v182, %v188
    %v191 = vmul.f32 %v183, %v189
    %v192 = vld [vmem:[#allocation7] sm:$0xff]
    %v193 = vld [vmem:[#allocation7 + $0x8] sm:$0xff]
    %v194 = vld [vmem:[#allocation7 + $0x10] sm:$0xff]
    %v195 = vld [vmem:[#allocation7 + $0x18] sm:$0xff]
    %v196 = vld [vmem:[#allocation7 + $0x20] sm:$0xff]
    %v197 = vld [vmem:[#allocation7 + $0x28] sm:$0xff]
    %v198 = vld [vmem:[#allocation7 + $0x30] sm:$0xff]
    %v199 = vld [vmem:[#allocation7 + $0x38] sm:$0xff]
    %v200 = vld [vmem:[#allocation7 + $0x40] sm:$0xff]
    %v201 = vld [vmem:[#allocation7 + $0x48] sm:$0xff]
    %v202 = vld [vmem:[#allocation7 + $0x50] sm:$0xff]
    %v203 = vld [vmem:[#allocation7 + $0x58] sm:$0xff]
    %v204 = vld [vmem:[#allocation7 + $0x60] sm:$0xff]
    %v205 = vld [vmem:[#allocation7 + $0x68] sm:$0xff]
    %v206 = vld [vmem:[#allocation7 + $0x70] sm:$0xff]
    %v207 = vld [vmem:[#allocation7 + $0x78] sm:$0xff]
    %v208 = vld [vmem:[%s4] sm:$0x1]
    %v210 = vlaneseq
    %v211 = vshrl.u32 %v210, 7
    %v212 = vsub.s32 0, %v211
    %v213 = vrot.slane %v208, %v212
    %215 = vmatprep.subr.mxu0 0.0
    %216 = vmatpush1.msra.mxu0 %v192
    %217 = vmatprep.subr.mxu0 0.0
    %218 = vmatpush1.msra.mxu0 %v193
    %219 = vmatprep.subr.mxu0 0.0
    %220 = vmatpush1.msra.mxu0 %v194
    %221 = vmatprep.subr.mxu0 0.0
    %222 = vmatpush1.msra.mxu0 %v195
    %223 = vmatprep.subr.mxu0 0.0
    %224 = vmatpush1.msra.mxu0 %v196
    %225 = vmatprep.subr.mxu0 0.0
    %226 = vmatpush1.msra.mxu0 %v197
    %227 = vmatprep.subr.mxu0 0.0
    %228 = vmatpush1.msra.mxu0 %v198
    %229 = vmatprep.subr.mxu0 0.0
    %230 = vmatpush1.msra.mxu0 %v199
    %231 = vmatprep.subr.mxu0 0.0
    %232 = vmatpush1.msra.mxu0 %v200
    %233 = vmatprep.subr.mxu0 0.0
    %234 = vmatpush1.msra.mxu0 %v201
    %235 = vmatprep.subr.mxu0 0.0
    %236 = vmatpush1.msra.mxu0 %v202
    %237 = vmatprep.subr.mxu0 0.0
    %238 = vmatpush1.msra.mxu0 %v203
    %239 = vmatprep.subr.mxu0 0.0
    %240 = vmatpush1.msra.mxu0 %v204
    %241 = vmatprep.subr.mxu0 0.0
    %242 = vmatpush1.msra.mxu0 %v205
    %243 = vmatprep.subr.mxu0 0.0
    %244 = vmatpush1.msra.mxu0 %v206
    %245 = vmatprep.subr.mxu0 0.0
    %246 = vmatpush1.msra.mxu0 %v207
    %247 = vmatprep.subr.mxu0 0.0
    %248 = vmatpush1.msra.mxu0 0.0
    %249 = vmatprep.subr.mxu0 0.0
    %250 = vmatpush1.msra.mxu0 0.0
    %251 = vmatprep.subr.mxu0 0.0
    %252 = vmatpush1.msra.mxu0 0.0
    %253 = vmatprep.subr.mxu0 0.0
    %254 = vmatpush1.msra.mxu0 0.0
    %255 = vmatprep.subr.mxu0 0.0
    %256 = vmatpush1.msra.mxu0 0.0
    %257 = vmatprep.subr.mxu0 0.0
    %258 = vmatpush1.msra.mxu0 0.0
    %259 = vmatprep.subr.mxu0 0.0
    %260 = vmatpush1.msra.mxu0 0.0
    %261 = vmatprep.subr.mxu0 0.0
    %262 = vmatpush1.msra.mxu0 0.0
    %263 = vmatprep.subr.mxu0 0.0
    %264 = vmatpush1.msra.mxu0 0.0
    %265 = vmatprep.subr.mxu0 0.0
    %266 = vmatpush1.msra.mxu0 0.0
    %267 = vmatprep.subr.mxu0 0.0
    %268 = vmatpush1.msra.mxu0 0.0
    %269 = vmatprep.subr.mxu0 0.0
    %270 = vmatpush1.msra.mxu0 0.0
    %271 = vmatprep.subr.mxu0 0.0
    %272 = vmatpush1.msra.mxu0 0.0
    %273 = vmatprep.subr.mxu0 0.0
    %274 = vmatpush1.msra.mxu0 0.0
    %275 = vmatprep.subr.mxu0 0.0
    %276 = vmatpush1.msra.mxu0 0.0
    %277 = vmatprep.subr.mxu0 0.0
    %278 = vmatpush1.msra.mxu0 0.0
    %279 = vmatprep.mubr.f32.mxu0 0.0
    %280 = vmatmul.mubr.f32.gmra.mrb[0].mxu0 %v190
    %v281 = vpop.f32.mrb[0].mxu0
    %v282 = vadd.f32 %v213, %v281
    %v283 = vpop.f32.mrb[0].mxu0
    %284 = vmatprep.mubr.f32.mxu0 0.0
    %285 = vmatmul.mubr.f32.gmra.mrb[0].mxu0 %v191
    %v286 = vpop.f32.mrb[0].mxu0
    %v287 = vadd.f32 %v213, %v286
    %v288 = vpop.f32.mrb[0].mxu0
    %289 = vdwg.mxu0
    %v290 = vmul.f32 %v282, 0.5
    %v291 = vmul.f32 %v287, 0.5
    %v292 = vmul.f32 %v282, 0.70710677
    %v293 = vmul.f32 %v287, 0.70710677
    %v294 = verf.f32.pop %v292
    %v295 = verf.f32.pop %v293
    %v296 = vadd.f32 %v294, 1.0
    %v297 = vadd.f32 %v295, 1.0
    %v298 = vmul.f32 %v290, %v296
    %v299 = vmul.f32 %v291, %v297
    %v300 = vld [vmem:[#allocation8] sm:$0xff]
    %v301 = vld [vmem:[#allocation8 + $0x8] sm:$0xff]
    %v302 = vld [vmem:[#allocation8 + $0x10] sm:$0xff]
    %v303 = vld [vmem:[#allocation8 + $0x18] sm:$0xff]
    %v304 = vld [vmem:[#allocation8 + $0x20] sm:$0xff]
    %v305 = vld [vmem:[#allocation8 + $0x28] sm:$0xff]
    %v306 = vld [vmem:[#allocation8 + $0x30] sm:$0xff]
    %v307 = vld [vmem:[#allocation8 + $0x38] sm:$0xff]
    %v308 = vld [vmem:[#allocation8 + $0x40] sm:$0xff]
    %v309 = vld [vmem:[#allocation8 + $0x48] sm:$0xff]
    %v310 = vld [vmem:[#allocation8 + $0x50] sm:$0xff]
    %v311 = vld [vmem:[#allocation8 + $0x58] sm:$0xff]
    %v312 = vld [vmem:[#allocation8 + $0x60] sm:$0xff]
    %v313 = vld [vmem:[#allocation8 + $0x68] sm:$0xff]
    %v314 = vld [vmem:[#allocation8 + $0x70] sm:$0xff]
    %v315 = vld [vmem:[#allocation8 + $0x78] sm:$0xff]
    %v316 = vld [vmem:[%s6] sm:$0x1]
    %v318 = vlaneseq
    %v319 = vshrl.u32 %v318, 7
    %v320 = vsub.s32 0, %v319
    %v321 = vrot.slane %v316, %v320
    %323 = vmatprep.subr.mxu0 0.0
    %324 = vmatpush1.msra.mxu0 %v300
    %325 = vmatprep.subr.mxu0 0.0
    %326 = vmatpush1.msra.mxu0 %v301
    %327 = vmatprep.subr.mxu0 0.0
    %328 = vmatpush1.msra.mxu0 %v302
    %329 = vmatprep.subr.mxu0 0.0
    %330 = vmatpush1.msra.mxu0 %v303
    %331 = vmatprep.subr.mxu0 0.0
    %332 = vmatpush1.msra.mxu0 %v304
    %333 = vmatprep.subr.mxu0 0.0
    %334 = vmatpush1.msra.mxu0 %v305
    %335 = vmatprep.subr.mxu0 0.0
    %336 = vmatpush1.msra.mxu0 %v306
    %337 = vmatprep.subr.mxu0 0.0
    %338 = vmatpush1.msra.mxu0 %v307
    %339 = vmatprep.subr.mxu0 0.0
    %340 = vmatpush1.msra.mxu0 %v308
    %341 = vmatprep.subr.mxu0 0.0
    %342 = vmatpush1.msra.mxu0 %v309
    %343 = vmatprep.subr.mxu0 0.0
    %344 = vmatpush1.msra.mxu0 %v310
    %345 = vmatprep.subr.mxu0 0.0
    %346 = vmatpush1.msra.mxu0 %v311
    %347 = vmatprep.subr.mxu0 0.0
    %348 = vmatpush1.msra.mxu0 %v312
    %349 = vmatprep.subr.mxu0 0.0
    %350 = vmatpush1.msra.mxu0 %v313
    %351 = vmatprep.subr.mxu0 0.0
    %352 = vmatpush1.msra.mxu0 %v314
    %353 = vmatprep.subr.mxu0 0.0
    %354 = vmatpush1.msra.mxu0 %v315
    %355 = vmatprep.subr.mxu0 0.0
    %356 = vmatpush1.msra.mxu0 0.0
    %357 = vmatprep.subr.mxu0 0.0
    %358 = vmatpush1.msra.mxu0 0.0
    %359 = vmatprep.subr.mxu0 0.0
    %360 = vmatpush1.msra.mxu0 0.0
    %361 = vmatprep.subr.mxu0 0.0
    %362 = vmatpush1.msra.mxu0 0.0
    %363 = vmatprep.subr.mxu0 0.0
    %364 = vmatpush1.msra.mxu0 0.0
    %365 = vmatprep.subr.mxu0 0.0
    %366 = vmatpush1.msra.mxu0 0.0
    %367 = vmatprep.subr.mxu0 0.0
    %368 = vmatpush1.msra.mxu0 0.0
    %369 = vmatprep.subr.mxu0 0.0
    %370 = vmatpush1.msra.mxu0 0.0
    %371 = vmatprep.subr.mxu0 0.0
    %372 = vmatpush1.msra.mxu0 0.0
    %373 = vmatprep.subr.mxu0 0.0
    %374 = vmatpush1.msra.mxu0 0.0
    %375 = vmatprep.subr.mxu0 0.0
    %376 = vmatpush1.msra.mxu0 0.0
    %377 = vmatprep.subr.mxu0 0.0
    %378 = vmatpush1.msra.mxu0 0.0
    %379 = vmatprep.subr.mxu0 0.0
    %380 = vmatpush1.msra.mxu0 0.0
    %381 = vmatprep.subr.mxu0 0.0
    %382 = vmatpush1.msra.mxu0 0.0
    %383 = vmatprep.subr.mxu0 0.0
    %384 = vmatpush1.msra.mxu0 0.0
    %385 = vmatprep.subr.mxu0 0.0
    %386 = vmatpush1.msra.mxu0 0.0
    %387 = vmatprep.mubr.f32.mxu0 0.0
    %388 = vmatmul.mubr.f32.gmra.mrb[0].mxu0 %v298
    %v389 = vpop.f32.mrb[0].mxu0
    %v390 = vadd.f32 %v321, %v389
    %v391 = vpop.f32.mrb[0].mxu0
    %392 = vmatprep.mubr.f32.mxu0 0.0
    %393 = vmatmul.mubr.f32.gmra.mrb[0].mxu0 %v299
    %v394 = vpop.f32.mrb[0].mxu0
    %v395 = vadd.f32 %v321, %v394
    %v396 = vpop.f32.mrb[0].mxu0
    %397 = vdwg.mxu0
    %398 = vst [vmem:[#allocation10] sm:$0xff] %v390
    %399 = vst [vmem:[#allocation10 + $0x8] sm:$0xff] %v395
    // Predicated region
    $region46: #{tpu_custom_call.1} parent=1 // pred_check
      _
    $region47: #{tpu_custom_call.1} parent=1 // pred_check_branch
      %401 = sbr.rel (0) target = $region49
    $region48: #{tpu_custom_call.1} parent=1 // pred_region
      %s403 = ssub.s32 256, 256
      %404 = vsyncadd [#allocation4], %s403
      %s405 = sshll.u32 [#allocation10], 4
      %s406 = int_to_ptr.vmem [resolvable:$true] %s405
      %411 = dma.vmem_to_hbm [thread:$0]  %s406, 256, %s7, [#allocation4], 128, 128, 8
    $region49: #{tpu_custom_call.1} parent=1 // pred_fallthru
      _
    // Predicated region
    $region50: #{tpu_custom_call.1} parent=1 // pred_check
      _
    $region51: #{tpu_custom_call.1} parent=1 // pred_check_branch
      %413 = sbr.rel (0) target = $region53
    $region52: #{tpu_custom_call.1} parent=1 // pred_region
      %414 = dma.done [#allocation4], 256
    $region53: #{tpu_custom_call.1} parent=1 // pred_fallthru
      _
    %415 = vsyncpa [#allocation3], 1
    %416 = vsyncpa [#allocation6], 1
    %417 = vsyncpa [#allocation9], 1
    %418 = vsyncpa [#allocation4], 1

</llo_original>
